<compile_context>
chip_gen: v6e
topology: v6e:2x2x1
jax: 0.10.0
libtpu: 0.0.40
codegen_flags: <defaults>
</compile_context>

<pallas_src>
import jax
import jax.numpy as jnp
import numpy as np
from jax.experimental import pallas as pl
from jax.experimental.pallas import tpu as pltpu

LANE = 128   # lane width: classifier output padded to this for lane-dense stores
B_PAD = 8    # sublane width: batch padded so per-step tiles are (8, H) aligned


def rnn_cls_kernel(ids_ref, pf_tab_ref, pb_tab_ref, whh_ref,
                   wcls_f_ref, wcls_b_ref, bcls_ref, out_ref,
                   xf_ref, hb_ref):
    # ids_ref:    SMEM (B, T) int32  — token ids (real, un-padded batch)
    # pf_tab_ref: VMEM (V, H)  f32   — embedding @ W_ih_f^T + (b_ih_f + b_hh_f)
    # pb_tab_ref: VMEM (V, H)  f32   — embedding @ W_ih_b^T + (b_ih_b + b_hh_b)
    # whh_ref:    VMEM (H, H)  f32   — W_hh_f^T (pre-transposed)
    # wcls_*_ref: VMEM (H, LANE) f32 — classifier halves, transposed + lane-padded
    # bcls_ref:   VMEM (1, LANE) f32
    # out_ref:    VMEM (B_PAD, LANE) f32
    # xf_ref:     VMEM scratch (T*B_PAD, H) — gathered fwd projections, time-major
    # hb_ref:     VMEM scratch (B_PAD, H)   — gathered bwd projection of token T-1
    B, T = ids_ref.shape
    b_pad = out_ref.shape[0]

    # ---- Gather phase (independent of the recurrence carry) ----------------
    # Zero first so padded batch rows (b >= B) carry zeros through the
    # recurrence instead of stale VMEM; they are sliced off in the wrapper.
    xf_ref[...] = jnp.zeros_like(xf_ref)
    hb_ref[...] = jnp.zeros_like(hb_ref)
    for t in range(T):
        for b in range(B):
            tok = ids_ref[b, t]
            xf_ref[pl.ds(t * b_pad + b, 1), :] = pf_tab_ref[pl.ds(tok, 1), :]
    for b in range(B):
        tok = ids_ref[b, T - 1]
        hb_ref[pl.ds(b, 1), :] = pb_tab_ref[pl.ds(tok, 1), :]

    # ---- Forward-direction tanh recurrence ----------------------------------
    whh = whh_ref[...]                               # (H, H), loaded once
    h = jnp.tanh(xf_ref[0:b_pad, :])                 # h0 == 0 -> no matmul at t=0
    for t in range(1, T):                            # static unroll: T is small
        pf = xf_ref[t * b_pad:(t + 1) * b_pad, :]    # aligned (8, H) tile
        h = jnp.tanh(pf + jnp.dot(h, whh, preferred_element_type=jnp.float32))
    # (Switch to lax.fori_loop carrying h if T ever grows beyond a handful.)

    # Backward direction, output at time T-1 (single step from h0 = 0):
    hb = jnp.tanh(hb_ref[...])                       # (B_PAD, H)

    # Dropout is identity at inference.  Split classifier -> no lane concat.
    out_ref[...] = (jnp.dot(h, wcls_f_ref[...], preferred_element_type=jnp.float32)
                    + jnp.dot(hb, wcls_b_ref[...], preferred_element_type=jnp.float32)
                    + bcls_ref[...])                 # (B_PAD, LANE) full-vreg store


def prepare_params(params):
    """One-time weight packing (hoisted off the per-call hot path)."""
    f32 = jnp.float32
    emb = params["embedding"].astype(f32)
    H = params["whh_f"].shape[0]
    pf_tab = emb @ params["wih_f"].astype(f32).T + (params["bih_f"] + params["bhh_f"])
    pb_tab = emb @ params["wih_b"].astype(f32).T + (params["bih_b"] + params["bhh_b"])
    wcls_f = jnp.zeros((H, LANE), f32).at[:, :2].set(params["w_cls"][:, :H].astype(f32).T)
    wcls_b = jnp.zeros((H, LANE), f32).at[:, :2].set(params["w_cls"][:, H:].astype(f32).T)
    bcls = jnp.zeros((1, LANE), f32).at[0, :2].set(params["b_cls"].astype(f32))
    return {
        "pf_tab": pf_tab.astype(f32),                # (vocab, H)
        "pb_tab": pb_tab.astype(f32),                # (vocab, H)
        "whh_t": params["whh_f"].astype(f32).T,      # (H, H)
        "wcls_f": wcls_f,                            # (H, LANE)
        "wcls_b": wcls_b,                            # (H, LANE)
        "bcls": bcls,                                # (1, LANE)
    }


@jax.jit
def rnn_model_forward(input_ids, attention_mask, packed):
    # attention_mask accepted for API parity; unused (as in the PyTorch forward).
    del attention_mask
    B, T = input_ids.shape
    H = packed["whh_t"].shape[0]
    out = pl.pallas_call(
        rnn_cls_kernel,
        out_shape=jax.ShapeDtypeStruct((B_PAD, LANE), jnp.float32),
        in_specs=[
            pl.BlockSpec(memory_space=pltpu.MemorySpace.SMEM),   # token ids
            pl.BlockSpec(memory_space=pltpu.MemorySpace.VMEM),   # fwd proj table
            pl.BlockSpec(memory_space=pltpu.MemorySpace.VMEM),   # bwd proj table
            pl.BlockSpec(memory_space=pltpu.MemorySpace.VMEM),   # W_hh_f^T
            pl.BlockSpec(memory_space=pltpu.MemorySpace.VMEM),   # classifier fwd half
            pl.BlockSpec(memory_space=pltpu.MemorySpace.VMEM),   # classifier bwd half
            pl.BlockSpec(memory_space=pltpu.MemorySpace.VMEM),   # classifier bias
        ],
        out_specs=pl.BlockSpec(memory_space=pltpu.MemorySpace.VMEM),
        scratch_shapes=[
            pltpu.VMEM((T * B_PAD, H), jnp.float32),             # gathered fwd proj
            pltpu.VMEM((B_PAD, H), jnp.float32),                 # gathered bwd proj
        ],
    )(input_ids.astype(jnp.int32), packed["pf_tab"], packed["pb_tab"],
      packed["whh_t"], packed["wcls_f"], packed["wcls_b"], packed["bcls"])
    return out[:B, :2]


def reference_forward(input_ids, params):
    emb = jnp.take(params["embedding"], input_ids, axis=0).astype(jnp.float32)
    B, T, E = emb.shape
    H = params["whh_f"].shape[0]
    h = jnp.zeros((B, H), jnp.float32)
    for t in range(T):
        h = jnp.tanh(emb[:, t, :] @ params["wih_f"].T + h @ params["whh_f"].T
                     + params["bih_f"] + params["bhh_f"])
    hb = jnp.tanh(emb[:, -1, :] @ params["wih_b"].T
                  + params["bih_b"] + params["bhh_b"])
    feat = jnp.concatenate([h, hb], axis=-1)
    return feat @ params["w_cls"].T + params["b_cls"]


def init_params(key, vocab_size, embedding_dim, hidden_size):
    ks = jax.random.split(key, 10)
    s = 1.0 / np.sqrt(hidden_size)
    u = lambda k, shape: jax.random.uniform(k, shape, jnp.float32, -s, s)
    return {
        "embedding": jax.random.normal(ks[0], (vocab_size, embedding_dim),
                                       jnp.float32),
        "wih_f": u(ks[1], (hidden_size, embedding_dim)),
        "whh_f": u(ks[2], (hidden_size, hidden_size)),
        "bih_f": u(ks[3], (hidden_size,)),
        "bhh_f": u(ks[4], (hidden_size,)),
        "wih_b": u(ks[5], (hidden_size, embedding_dim)),
        "bih_b": u(ks[6], (hidden_size,)),
        "bhh_b": u(ks[7], (hidden_size,)),
        "w_cls": u(ks[8], (2, 2 * hidden_size)),
        "b_cls": u(ks[9], (2,)),
    }


if __name__ == "__main__":
    vocab_size, embedding_dim, hidden_size = 50, 32, 32
    B, T = 2, 8

    key = jax.random.PRNGKey(0)
    kp, kid = jax.random.split(key)
    params = init_params(kp, vocab_size, embedding_dim, hidden_size)
    packed = prepare_params(params)          # one-time weight/table packing

    input_ids = jax.random.randint(kid, (B, T), 0, vocab_size, dtype=jnp.int32)
    attention_mask = jnp.ones((B, T), dtype=jnp.int32)

    logits = jax.block_until_ready(rnn_model_forward(input_ids, attention_mask, packed))
    ref = jax.block_until_ready(reference_forward(input_ids, params))

    assert logits.shape == (B, 2)
    assert np.allclose(np.asarray(logits), np.asarray(ref), atol=1e-3, rtol=1e-3)

    print("KERNEL_OK")
</pallas_src>

<mosaic_0001>
module attributes {stable_mosaic.version = 11 : i64} {
  func.func @rnn_cls_kernel(%arg0: memref<2x8xi32, #tpu.memory_space<smem>>, %arg1: memref<50x32xf32, #tpu.memory_space<vmem>>, %arg2: memref<50x32xf32, #tpu.memory_space<vmem>>, %arg3: memref<32x32xf32, #tpu.memory_space<vmem>>, %arg4: memref<32x128xf32, #tpu.memory_space<vmem>>, %arg5: memref<32x128xf32, #tpu.memory_space<vmem>>, %arg6: memref<1x128xf32, #tpu.memory_space<vmem>>, %arg7: memref<8x128xf32, #tpu.memory_space<vmem>>, %arg8: memref<64x32xf32, #tpu.memory_space<vmem>>, %arg9: memref<8x32xf32, #tpu.memory_space<vmem>>) attributes {dimension_semantics = [], scalar_prefetch = 0 : i64, scratch_operands = 2 : i64, tpu.core_type = #tpu.core_type<tc>} {
    %cst = arith.constant 0.000000e+00 : f32
    %0 = vector.broadcast %cst : f32 to vector<64x32xf32>
    %c0 = arith.constant 0 : index
    %c0_0 = arith.constant 0 : index
    %1 = vector.load %arg8[%c0, %c0_0] : memref<64x32xf32, #tpu.memory_space<vmem>>, vector<64x32xf32>
    tpu.vector_store %arg8[%c0, %c0_0], %0 {strides = array<i32>} : memref<64x32xf32, #tpu.memory_space<vmem>>, vector<64x32xf32>,
    %cst_1 = arith.constant 0.000000e+00 : f32
    %2 = vector.broadcast %cst_1 : f32 to vector<8x32xf32>
    %c0_2 = arith.constant 0 : index
    %c0_3 = arith.constant 0 : index
    %3 = vector.load %arg9[%c0_2, %c0_3] : memref<8x32xf32, #tpu.memory_space<vmem>>, vector<8x32xf32>
    tpu.vector_store %arg9[%c0_2, %c0_3], %2 {strides = array<i32>} : memref<8x32xf32, #tpu.memory_space<vmem>>, vector<8x32xf32>,
    %c0_4 = arith.constant 0 : index
    %c0_5 = arith.constant 0 : index
    %4 = memref.load %arg0[%c0_4, %c0_5] : memref<2x8xi32, #tpu.memory_space<smem>>
    %5 = arith.index_cast %4 : i32 to index
    %c0_6 = arith.constant 0 : index
    %6 = vector.load %arg1[%5, %c0_6] : memref<50x32xf32, #tpu.memory_space<vmem>>, vector<1x32xf32>
    %c0_7 = arith.constant 0 : index
    %c0_8 = arith.constant 0 : index
    %7 = vector.load %arg8[%c0_7, %c0_8] : memref<64x32xf32, #tpu.memory_space<vmem>>, vector<1x32xf32>
    tpu.vector_store %arg8[%c0_7, %c0_8], %6 {strides = array<i32>} : memref<64x32xf32, #tpu.memory_space<vmem>>, vector<1x32xf32>,
    %c1 = arith.constant 1 : index
    %c0_9 = arith.constant 0 : index
    %8 = memref.load %arg0[%c1, %c0_9] : memref<2x8xi32, #tpu.memory_space<smem>>
    %9 = arith.index_cast %8 : i32 to index
    %c0_10 = arith.constant 0 : index
    %10 = vector.load %arg1[%9, %c0_10] : memref<50x32xf32, #tpu.memory_space<vmem>>, vector<1x32xf32>
    %c1_11 = arith.constant 1 : index
    %c0_12 = arith.constant 0 : index
    %11 = vector.load %arg8[%c1_11, %c0_12] : memref<64x32xf32, #tpu.memory_space<vmem>>, vector<1x32xf32>
    tpu.vector_store %arg8[%c1_11, %c0_12], %10 {strides = array<i32>} : memref<64x32xf32, #tpu.memory_space<vmem>>, vector<1x32xf32>,
    %c0_13 = arith.constant 0 : index
    %c1_14 = arith.constant 1 : index
    %12 = memref.load %arg0[%c0_13, %c1_14] : memref<2x8xi32, #tpu.memory_space<smem>>
    %13 = arith.index_cast %12 : i32 to index
    %c0_15 = arith.constant 0 : index
    %14 = vector.load %arg1[%13, %c0_15] : memref<50x32xf32, #tpu.memory_space<vmem>>, vector<1x32xf32>
    %c8 = arith.constant 8 : index
    %c0_16 = arith.constant 0 : index
    %15 = vector.load %arg8[%c8, %c0_16] : memref<64x32xf32, #tpu.memory_space<vmem>>, vector<1x32xf32>
    tpu.vector_store %arg8[%c8, %c0_16], %14 {strides = array<i32>} : memref<64x32xf32, #tpu.memory_space<vmem>>, vector<1x32xf32>,
    %c1_17 = arith.constant 1 : index
    %c1_18 = arith.constant 1 : index
    %16 = memref.load %arg0[%c1_17, %c1_18] : memref<2x8xi32, #tpu.memory_space<smem>>
    %17 = arith.index_cast %16 : i32 to index
    %c0_19 = arith.constant 0 : index
    %18 = vector.load %arg1[%17, %c0_19] : memref<50x32xf32, #tpu.memory_space<vmem>>, vector<1x32xf32>
    %c9 = arith.constant 9 : index
    %c0_20 = arith.constant 0 : index
    %19 = vector.load %arg8[%c9, %c0_20] : memref<64x32xf32, #tpu.memory_space<vmem>>, vector<1x32xf32>
    tpu.vector_store %arg8[%c9, %c0_20], %18 {strides = array<i32>} : memref<64x32xf32, #tpu.memory_space<vmem>>, vector<1x32xf32>,
    %c0_21 = arith.constant 0 : index
    %c2 = arith.constant 2 : index
    %20 = memref.load %arg0[%c0_21, %c2] : memref<2x8xi32, #tpu.memory_space<smem>>
    %21 = arith.index_cast %20 : i32 to index
    %c0_22 = arith.constant 0 : index
    %22 = vector.load %arg1[%21, %c0_22] : memref<50x32xf32, #tpu.memory_space<vmem>>, vector<1x32xf32>
    %c16 = arith.constant 16 : index
    %c0_23 = arith.constant 0 : index
    %23 = vector.load %arg8[%c16, %c0_23] : memref<64x32xf32, #tpu.memory_space<vmem>>, vector<1x32xf32>
    tpu.vector_store %arg8[%c16, %c0_23], %22 {strides = array<i32>} : memref<64x32xf32, #tpu.memory_space<vmem>>, vector<1x32xf32>,
    %c1_24 = arith.constant 1 : index
    %c2_25 = arith.constant 2 : index
    %24 = memref.load %arg0[%c1_24, %c2_25] : memref<2x8xi32, #tpu.memory_space<smem>>
    %25 = arith.index_cast %24 : i32 to index
    %c0_26 = arith.constant 0 : index
    %26 = vector.load %arg1[%25, %c0_26] : memref<50x32xf32, #tpu.memory_space<vmem>>, vector<1x32xf32>
    %c17 = arith.constant 17 : index
    %c0_27 = arith.constant 0 : index
    %27 = vector.load %arg8[%c17, %c0_27] : memref<64x32xf32, #tpu.memory_space<vmem>>, vector<1x32xf32>
    tpu.vector_store %arg8[%c17, %c0_27], %26 {strides = array<i32>} : memref<64x32xf32, #tpu.memory_space<vmem>>, vector<1x32xf32>,
    %c0_28 = arith.constant 0 : index
    %c3 = arith.constant 3 : index
    %28 = memref.load %arg0[%c0_28, %c3] : memref<2x8xi32, #tpu.memory_space<smem>>
    %29 = arith.index_cast %28 : i32 to index
    %c0_29 = arith.constant 0 : index
    %30 = vector.load %arg1[%29, %c0_29] : memref<50x32xf32, #tpu.memory_space<vmem>>, vector<1x32xf32>
    %c24 = arith.constant 24 : index
    %c0_30 = arith.constant 0 : index
    %31 = vector.load %arg8[%c24, %c0_30] : memref<64x32xf32, #tpu.memory_space<vmem>>, vector<1x32xf32>
    tpu.vector_store %arg8[%c24, %c0_30], %30 {strides = array<i32>} : memref<64x32xf32, #tpu.memory_space<vmem>>, vector<1x32xf32>,
    %c1_31 = arith.constant 1 : index
    %c3_32 = arith.constant 3 : index
    %32 = memref.load %arg0[%c1_31, %c3_32] : memref<2x8xi32, #tpu.memory_space<smem>>
    %33 = arith.index_cast %32 : i32 to index
    %c0_33 = arith.constant 0 : index
    %34 = vector.load %arg1[%33, %c0_33] : memref<50x32xf32, #tpu.memory_space<vmem>>, vector<1x32xf32>
    %c25 = arith.constant 25 : index
    %c0_34 = arith.constant 0 : index
    %35 = vector.load %arg8[%c25, %c0_34] : memref<64x32xf32, #tpu.memory_space<vmem>>, vector<1x32xf32>
    tpu.vector_store %arg8[%c25, %c0_34], %34 {strides = array<i32>} : memref<64x32xf32, #tpu.memory_space<vmem>>, vector<1x32xf32>,
    %c0_35 = arith.constant 0 : index
    %c4 = arith.constant 4 : index
    %36 = memref.load %arg0[%c0_35, %c4] : memref<2x8xi32, #tpu.memory_space<smem>>
    %37 = arith.index_cast %36 : i32 to index
    %c0_36 = arith.constant 0 : index
    %38 = vector.load %arg1[%37, %c0_36] : memref<50x32xf32, #tpu.memory_space<vmem>>, vector<1x32xf32>
    %c32 = arith.constant 32 : index
    %c0_37 = arith.constant 0 : index
    %39 = vector.load %arg8[%c32, %c0_37] : memref<64x32xf32, #tpu.memory_space<vmem>>, vector<1x32xf32>
    tpu.vector_store %arg8[%c32, %c0_37], %38 {strides = array<i32>} : memref<64x32xf32, #tpu.memory_space<vmem>>, vector<1x32xf32>,
    %c1_38 = arith.constant 1 : index
    %c4_39 = arith.constant 4 : index
    %40 = memref.load %arg0[%c1_38, %c4_39] : memref<2x8xi32, #tpu.memory_space<smem>>
    %41 = arith.index_cast %40 : i32 to index
    %c0_40 = arith.constant 0 : index
    %42 = vector.load %arg1[%41, %c0_40] : memref<50x32xf32, #tpu.memory_space<vmem>>, vector<1x32xf32>
    %c33 = arith.constant 33 : index
    %c0_41 = arith.constant 0 : index
    %43 = vector.load %arg8[%c33, %c0_41] : memref<64x32xf32, #tpu.memory_space<vmem>>, vector<1x32xf32>
    tpu.vector_store %arg8[%c33, %c0_41], %42 {strides = array<i32>} : memref<64x32xf32, #tpu.memory_space<vmem>>, vector<1x32xf32>,
    %c0_42 = arith.constant 0 : index
    %c5 = arith.constant 5 : index
    %44 = memref.load %arg0[%c0_42, %c5] : memref<2x8xi32, #tpu.memory_space<smem>>
    %45 = arith.index_cast %44 : i32 to index
    %c0_43 = arith.constant 0 : index
    %46 = vector.load %arg1[%45, %c0_43] : memref<50x32xf32, #tpu.memory_space<vmem>>, vector<1x32xf32>
    %c40 = arith.constant 40 : index
    %c0_44 = arith.constant 0 : index
    %47 = vector.load %arg8[%c40, %c0_44] : memref<64x32xf32, #tpu.memory_space<vmem>>, vector<1x32xf32>
    tpu.vector_store %arg8[%c40, %c0_44], %46 {strides = array<i32>} : memref<64x32xf32, #tpu.memory_space<vmem>>, vector<1x32xf32>,
    %c1_45 = arith.constant 1 : index
    %c5_46 = arith.constant 5 : index
    %48 = memref.load %arg0[%c1_45, %c5_46] : memref<2x8xi32, #tpu.memory_space<smem>>
    %49 = arith.index_cast %48 : i32 to index
    %c0_47 = arith.constant 0 : index
    %50 = vector.load %arg1[%49, %c0_47] : memref<50x32xf32, #tpu.memory_space<vmem>>, vector<1x32xf32>
    %c41 = arith.constant 41 : index
    %c0_48 = arith.constant 0 : index
    %51 = vector.load %arg8[%c41, %c0_48] : memref<64x32xf32, #tpu.memory_space<vmem>>, vector<1x32xf32>
    tpu.vector_store %arg8[%c41, %c0_48], %50 {strides = array<i32>} : memref<64x32xf32, #tpu.memory_space<vmem>>, vector<1x32xf32>,
    %c0_49 = arith.constant 0 : index
    %c6 = arith.constant 6 : index
    %52 = memref.load %arg0[%c0_49, %c6] : memref<2x8xi32, #tpu.memory_space<smem>>
    %53 = arith.index_cast %52 : i32 to index
    %c0_50 = arith.constant 0 : index
    %54 = vector.load %arg1[%53, %c0_50] : memref<50x32xf32, #tpu.memory_space<vmem>>, vector<1x32xf32>
    %c48 = arith.constant 48 : index
    %c0_51 = arith.constant 0 : index
    %55 = vector.load %arg8[%c48, %c0_51] : memref<64x32xf32, #tpu.memory_space<vmem>>, vector<1x32xf32>
    tpu.vector_store %arg8[%c48, %c0_51], %54 {strides = array<i32>} : memref<64x32xf32, #tpu.memory_space<vmem>>, vector<1x32xf32>,
    %c1_52 = arith.constant 1 : index
    %c6_53 = arith.constant 6 : index
    %56 = memref.load %arg0[%c1_52, %c6_53] : memref<2x8xi32, #tpu.memory_space<smem>>
    %57 = arith.index_cast %56 : i32 to index
    %c0_54 = arith.constant 0 : index
    %58 = vector.load %arg1[%57, %c0_54] : memref<50x32xf32, #tpu.memory_space<vmem>>, vector<1x32xf32>
    %c49 = arith.constant 49 : index
    %c0_55 = arith.constant 0 : index
    %59 = vector.load %arg8[%c49, %c0_55] : memref<64x32xf32, #tpu.memory_space<vmem>>, vector<1x32xf32>
    tpu.vector_store %arg8[%c49, %c0_55], %58 {strides = array<i32>} : memref<64x32xf32, #tpu.memory_space<vmem>>, vector<1x32xf32>,
    %c0_56 = arith.constant 0 : index
    %c7 = arith.constant 7 : index
    %60 = memref.load %arg0[%c0_56, %c7] : memref<2x8xi32, #tpu.memory_space<smem>>
    %61 = arith.index_cast %60 : i32 to index
    %c0_57 = arith.constant 0 : index
    %62 = vector.load %arg1[%61, %c0_57] : memref<50x32xf32, #tpu.memory_space<vmem>>, vector<1x32xf32>
    %c56 = arith.constant 56 : index
    %c0_58 = arith.constant 0 : index
    %63 = vector.load %arg8[%c56, %c0_58] : memref<64x32xf32, #tpu.memory_space<vmem>>, vector<1x32xf32>
    tpu.vector_store %arg8[%c56, %c0_58], %62 {strides = array<i32>} : memref<64x32xf32, #tpu.memory_space<vmem>>, vector<1x32xf32>,
    %c1_59 = arith.constant 1 : index
    %c7_60 = arith.constant 7 : index
    %64 = memref.load %arg0[%c1_59, %c7_60] : memref<2x8xi32, #tpu.memory_space<smem>>
    %65 = arith.index_cast %64 : i32 to index
    %c0_61 = arith.constant 0 : index
    %66 = vector.load %arg1[%65, %c0_61] : memref<50x32xf32, #tpu.memory_space<vmem>>, vector<1x32xf32>
    %c57 = arith.constant 57 : index
    %c0_62 = arith.constant 0 : index
    %67 = vector.load %arg8[%c57, %c0_62] : memref<64x32xf32, #tpu.memory_space<vmem>>, vector<1x32xf32>
    tpu.vector_store %arg8[%c57, %c0_62], %66 {strides = array<i32>} : memref<64x32xf32, #tpu.memory_space<vmem>>, vector<1x32xf32>,
    %c0_63 = arith.constant 0 : index
    %c7_64 = arith.constant 7 : index
    %68 = memref.load %arg0[%c0_63, %c7_64] : memref<2x8xi32, #tpu.memory_space<smem>>
    %69 = arith.index_cast %68 : i32 to index
    %c0_65 = arith.constant 0 : index
    %70 = vector.load %arg2[%69, %c0_65] : memref<50x32xf32, #tpu.memory_space<vmem>>, vector<1x32xf32>
    %c0_66 = arith.constant 0 : index
    %c0_67 = arith.constant 0 : index
    %71 = vector.load %arg9[%c0_66, %c0_67] : memref<8x32xf32, #tpu.memory_space<vmem>>, vector<1x32xf32>
    tpu.vector_store %arg9[%c0_66, %c0_67], %70 {strides = array<i32>} : memref<8x32xf32, #tpu.memory_space<vmem>>, vector<1x32xf32>,
    %c1_68 = arith.constant 1 : index
    %c7_69 = arith.constant 7 : index
    %72 = memref.load %arg0[%c1_68, %c7_69] : memref<2x8xi32, #tpu.memory_space<smem>>
    %73 = arith.index_cast %72 : i32 to index
    %c0_70 = arith.constant 0 : index
    %74 = vector.load %arg2[%73, %c0_70] : memref<50x32xf32, #tpu.memory_space<vmem>>, vector<1x32xf32>
    %c1_71 = arith.constant 1 : index
    %c0_72 = arith.constant 0 : index
    %75 = vector.load %arg9[%c1_71, %c0_72] : memref<8x32xf32, #tpu.memory_space<vmem>>, vector<1x32xf32>
    tpu.vector_store %arg9[%c1_71, %c0_72], %74 {strides = array<i32>} : memref<8x32xf32, #tpu.memory_space<vmem>>, vector<1x32xf32>,
    %c0_73 = arith.constant 0 : index
    %c0_74 = arith.constant 0 : index
    %76 = vector.load %arg3[%c0_73, %c0_74] : memref<32x32xf32, #tpu.memory_space<vmem>>, vector<32x32xf32>
    %c0_75 = arith.constant 0 : index
    %c0_76 = arith.constant 0 : index
    %77 = vector.load %arg8[%c0_75, %c0_76] : memref<64x32xf32, #tpu.memory_space<vmem>>, vector<8x32xf32>
    %78 = math.tanh %77 : vector<8x32xf32>
    %c8_77 = arith.constant 8 : index
    %c0_78 = arith.constant 0 : index
    %79 = vector.load %arg8[%c8_77, %c0_78] : memref<64x32xf32, #tpu.memory_space<vmem>>, vector<8x32xf32>
    %cst_79 = arith.constant dense<0.000000e+00> : vector<8x32xf32>
    %80 = tpu.matmul %78, %76, %cst_79 {dimension_numbers = #tpu.dot_dimension_numbers<[1], [0], [0], [1], [0, 0, 1, 1], [], []>} : vector<8x32xf32>, vector<32x32xf32>, vector<8x32xf32> -> vector<8x32xf32>
    %81 = arith.addf %79, %80 : vector<8x32xf32>
    %82 = math.tanh %81 : vector<8x32xf32>
    %c16_80 = arith.constant 16 : index
    %c0_81 = arith.constant 0 : index
    %83 = vector.load %arg8[%c16_80, %c0_81] : memref<64x32xf32, #tpu.memory_space<vmem>>, vector<8x32xf32>
    %cst_82 = arith.constant dense<0.000000e+00> : vector<8x32xf32>
    %84 = tpu.matmul %82, %76, %cst_82 {dimension_numbers = #tpu.dot_dimension_numbers<[1], [0], [0], [1], [0, 0, 1, 1], [], []>} : vector<8x32xf32>, vector<32x32xf32>, vector<8x32xf32> -> vector<8x32xf32>
    %85 = arith.addf %83, %84 : vector<8x32xf32>
    %86 = math.tanh %85 : vector<8x32xf32>
    %c24_83 = arith.constant 24 : index
    %c0_84 = arith.constant 0 : index
    %87 = vector.load %arg8[%c24_83, %c0_84] : memref<64x32xf32, #tpu.memory_space<vmem>>, vector<8x32xf32>
    %cst_85 = arith.constant dense<0.000000e+00> : vector<8x32xf32>
    %88 = tpu.matmul %86, %76, %cst_85 {dimension_numbers = #tpu.dot_dimension_numbers<[1], [0], [0], [1], [0, 0, 1, 1], [], []>} : vector<8x32xf32>, vector<32x32xf32>, vector<8x32xf32> -> vector<8x32xf32>
    %89 = arith.addf %87, %88 : vector<8x32xf32>
    %90 = math.tanh %89 : vector<8x32xf32>
    %c32_86 = arith.constant 32 : index
    %c0_87 = arith.constant 0 : index
    %91 = vector.load %arg8[%c32_86, %c0_87] : memref<64x32xf32, #tpu.memory_space<vmem>>, vector<8x32xf32>
    %cst_88 = arith.constant dense<0.000000e+00> : vector<8x32xf32>
    %92 = tpu.matmul %90, %76, %cst_88 {dimension_numbers = #tpu.dot_dimension_numbers<[1], [0], [0], [1], [0, 0, 1, 1], [], []>} : vector<8x32xf32>, vector<32x32xf32>, vector<8x32xf32> -> vector<8x32xf32>
    %93 = arith.addf %91, %92 : vector<8x32xf32>
    %94 = math.tanh %93 : vector<8x32xf32>
    %c40_89 = arith.constant 40 : index
    %c0_90 = arith.constant 0 : index
    %95 = vector.load %arg8[%c40_89, %c0_90] : memref<64x32xf32, #tpu.memory_space<vmem>>, vector<8x32xf32>
    %cst_91 = arith.constant dense<0.000000e+00> : vector<8x32xf32>
    %96 = tpu.matmul %94, %76, %cst_91 {dimension_numbers = #tpu.dot_dimension_numbers<[1], [0], [0], [1], [0, 0, 1, 1], [], []>} : vector<8x32xf32>, vector<32x32xf32>, vector<8x32xf32> -> vector<8x32xf32>
    %97 = arith.addf %95, %96 : vector<8x32xf32>
    %98 = math.tanh %97 : vector<8x32xf32>
    %c48_92 = arith.constant 48 : index
    %c0_93 = arith.constant 0 : index
    %99 = vector.load %arg8[%c48_92, %c0_93] : memref<64x32xf32, #tpu.memory_space<vmem>>, vector<8x32xf32>
    %cst_94 = arith.constant dense<0.000000e+00> : vector<8x32xf32>
    %100 = tpu.matmul %98, %76, %cst_94 {dimension_numbers = #tpu.dot_dimension_numbers<[1], [0], [0], [1], [0, 0, 1, 1], [], []>} : vector<8x32xf32>, vector<32x32xf32>, vector<8x32xf32> -> vector<8x32xf32>
    %101 = arith.addf %99, %100 : vector<8x32xf32>
    %102 = math.tanh %101 : vector<8x32xf32>
    %c56_95 = arith.constant 56 : index
    %c0_96 = arith.constant 0 : index
    %103 = vector.load %arg8[%c56_95, %c0_96] : memref<64x32xf32, #tpu.memory_space<vmem>>, vector<8x32xf32>
    %cst_97 = arith.constant dense<0.000000e+00> : vector<8x32xf32>
    %104 = tpu.matmul %102, %76, %cst_97 {dimension_numbers = #tpu.dot_dimension_numbers<[1], [0], [0], [1], [0, 0, 1, 1], [], []>} : vector<8x32xf32>, vector<32x32xf32>, vector<8x32xf32> -> vector<8x32xf32>
    %105 = arith.addf %103, %104 : vector<8x32xf32>
    %106 = math.tanh %105 : vector<8x32xf32>
    %c0_98 = arith.constant 0 : index
    %c0_99 = arith.constant 0 : index
    %107 = vector.load %arg9[%c0_98, %c0_99] : memref<8x32xf32, #tpu.memory_space<vmem>>, vector<8x32xf32>
    %108 = math.tanh %107 : vector<8x32xf32>
    %c0_100 = arith.constant 0 : index
    %c0_101 = arith.constant 0 : index
    %109 = vector.load %arg4[%c0_100, %c0_101] : memref<32x128xf32, #tpu.memory_space<vmem>>, vector<32x128xf32>
    %cst_102 = arith.constant dense<0.000000e+00> : vector<8x128xf32>
    %110 = tpu.matmul %106, %109, %cst_102 {dimension_numbers = #tpu.dot_dimension_numbers<[1], [0], [0], [1], [0, 0, 1, 1], [], []>} : vector<8x32xf32>, vector<32x128xf32>, vector<8x128xf32> -> vector<8x128xf32>
    %c0_103 = arith.constant 0 : index
    %c0_104 = arith.constant 0 : index
    %111 = vector.load %arg5[%c0_103, %c0_104] : memref<32x128xf32, #tpu.memory_space<vmem>>, vector<32x128xf32>
    %cst_105 = arith.constant dense<0.000000e+00> : vector<8x128xf32>
    %112 = tpu.matmul %108, %111, %cst_105 {dimension_numbers = #tpu.dot_dimension_numbers<[1], [0], [0], [1], [0, 0, 1, 1], [], []>} : vector<8x32xf32>, vector<32x128xf32>, vector<8x128xf32> -> vector<8x128xf32>
    %113 = arith.addf %110, %112 : vector<8x128xf32>
    %c0_106 = arith.constant 0 : index
    %c0_107 = arith.constant 0 : index
    %114 = vector.load %arg6[%c0_106, %c0_107] : memref<1x128xf32, #tpu.memory_space<vmem>>, vector<1x128xf32>
    %115 = vector.broadcast %114 : vector<1x128xf32> to vector<8x128xf32>
    %116 = arith.addf %113, %115 : vector<8x128xf32>
    %c0_108 = arith.constant 0 : index
    %c0_109 = arith.constant 0 : index
    %117 = vector.load %arg7[%c0_108, %c0_109] : memref<8x128xf32, #tpu.memory_space<vmem>>, vector<8x128xf32>
    tpu.vector_store %arg7[%c0_108, %c0_109], %116 {strides = array<i32>} : memref<8x128xf32, #tpu.memory_space<vmem>>, vector<8x128xf32>,
    return
  }
}

</mosaic_0001>

<llo_original>
// kernel: rnn_model_forward.1
$region0: #{rnn_model_forward.1}
  #allocation0 [shape = 'u32[]', space=smem, size = 0x4, offset = 0x4, fixed_abs, tag = 'smem constant byte address 0x4 - core index']
  #allocation1 [shape = 'u32[144,128]{1,0:T(1,128)}', space=vmem, size = 0x12000, scoped, tag = 'internal scratch']
  #allocation2 [shape = 'f32[64,32]{1,0:T(8,128)}', space=vmem, size = 0x8000, scoped, tag = 'scratch operand']
  #allocation3 [shape = 'f32[8,32]{1,0:T(8,128)}', space=vmem, size = 0x1000, scoped, tag = 'scratch operand']
  %s0 = inlined_call_operand.vmem [shape: s32[2,8], index: 0, kind: input, shape index: {}]
  %s1 = inlined_call_operand.vmem [shape: f32[50,32], index: 1, kind: input, shape index: {}]
  %s2 = inlined_call_operand.vmem [shape: f32[50,32], index: 2, kind: input, shape index: {}]
  %s3 = inlined_call_operand.vmem [shape: f32[32,32], index: 3, kind: input, shape index: {}]
  %s4 = inlined_call_operand.vmem [shape: f32[32,128], index: 4, kind: input, shape index: {}]
  %s5 = inlined_call_operand.vmem [shape: f32[32,128], index: 5, kind: input, shape index: {}]
  %s6 = inlined_call_operand.vmem [shape: f32[1,128], index: 6, kind: input, shape index: {}]
  %s7 = inlined_call_operand.vmem [shape: f32[8,128], index: 7, kind: output, shape index: {}]
  %s8 = sld [smem:[#allocation0]]
  $region42: #{rnn_model_forward.1} parent=0
    _
  %s10 = ssub.s32 1, %s8
  %s11 = scalar_select 0, %s10, %s8
  $region1: #{rnn_model_forward.1} parent=0
    #allocation4 [shape = 'u8[1024]{0}', space=smem, size = 0x400, scoped, tag = 'input window, operand 0, single buffered']
    #allocation5 [shape = 's32[1]{0}', space=sflag, size = 0x4, scoped, tag = 'scoped memory for rnn_model_forward.1']
    %12 = vsyncpa [#allocation5], 0
    // Predicated region
    $region2: #{rnn_model_forward.1} parent=1 // pred_check
      _
    $region3: #{rnn_model_forward.1} parent=1 // pred_check_branch
      %14 = sbr.rel (0) target = $region5
    $region4: #{rnn_model_forward.1} parent=1 // pred_region
      %s16 = ssub.s32 32, 32
      %17 = vsyncadd [#allocation5], %s16
      %s19 = sshll.u32 %s0, 4
      %s20 = int_to_ptr.vmem [resolvable:$true] %s19
      %22 = dma.vmem_to_smem %s20, 32, [#allocation4], [#allocation5]
    $region5: #{rnn_model_forward.1} parent=1 // pred_fallthru
      _
    // Predicated region
    $region6: #{rnn_model_forward.1} parent=1 // pred_check
      _
    $region7: #{rnn_model_forward.1} parent=1 // pred_check_branch
      %24 = sbr.rel (0) target = $region9
    $region8: #{rnn_model_forward.1} parent=1 // pred_region
      _
    $region9: #{rnn_model_forward.1} parent=1 // pred_fallthru
      _
    // Predicated region
    $region10: #{rnn_model_forward.1} parent=1 // pred_check
      _
    $region11: #{rnn_model_forward.1} parent=1 // pred_check_branch
      %26 = sbr.rel (0) target = $region13
    $region12: #{rnn_model_forward.1} parent=1 // pred_region
      _
    $region13: #{rnn_model_forward.1} parent=1 // pred_fallthru
      _
    // Predicated region
    $region14: #{rnn_model_forward.1} parent=1 // pred_check
      _
    $region15: #{rnn_model_forward.1} parent=1 // pred_check_branch
      %28 = sbr.rel (0) target = $region17
    $region16: #{rnn_model_forward.1} parent=1 // pred_region
      _
    $region17: #{rnn_model_forward.1} parent=1 // pred_fallthru
      _
    // Predicated region
    $region18: #{rnn_model_forward.1} parent=1 // pred_check
      _
    $region19: #{rnn_model_forward.1} parent=1 // pred_check_branch
      %30 = sbr.rel (0) target = $region21
    $region20: #{rnn_model_forward.1} parent=1 // pred_region
      _
    $region21: #{rnn_model_forward.1} parent=1 // pred_fallthru
      _
    // Predicated region
    $region22: #{rnn_model_forward.1} parent=1 // pred_check
      _
    $region23: #{rnn_model_forward.1} parent=1 // pred_check_branch
      %32 = sbr.rel (0) target = $region25
    $region24: #{rnn_model_forward.1} parent=1 // pred_region
      _
    $region25: #{rnn_model_forward.1} parent=1 // pred_fallthru
      _
    // Predicated region
    $region26: #{rnn_model_forward.1} parent=1 // pred_check
      _
    $region27: #{rnn_model_forward.1} parent=1 // pred_check_branch
      %34 = sbr.rel (0) target = $region29
    $region28: #{rnn_model_forward.1} parent=1 // pred_region
      _
    $region29: #{rnn_model_forward.1} parent=1 // pred_fallthru
      _
    // Predicated region
    $region30: #{rnn_model_forward.1} parent=1 // pred_check
      _
    $region31: #{rnn_model_forward.1} parent=1 // pred_check_branch
      %36 = sbr.rel (0) target = $region33
    $region32: #{rnn_model_forward.1} parent=1 // pred_region
      %37 = dma.done [#allocation5], 32
    $region33: #{rnn_model_forward.1} parent=1 // pred_fallthru
      _
    %38 = sfence
    %vm39 = vcmask 261120
    %40 = vst.msk [vmem:[#allocation2] sm:$0xff] %vm39, 0.0
    %41 = vst.msk [vmem:[#allocation2 + $0x8] sm:$0xff] %vm39, 0.0
    %42 = vst.msk [vmem:[#allocation2 + $0x10] sm:$0xff] %vm39, 0.0
    %43 = vst.msk [vmem:[#allocation2 + $0x18] sm:$0xff] %vm39, 0.0
    %44 = vst.msk [vmem:[#allocation2 + $0x20] sm:$0xff] %vm39, 0.0
    %45 = vst.msk [vmem:[#allocation2 + $0x28] sm:$0xff] %vm39, 0.0
    %46 = vst.msk [vmem:[#allocation2 + $0x30] sm:$0xff] %vm39, 0.0
    %47 = vst.msk [vmem:[#allocation2 + $0x38] sm:$0xff] %vm39, 0.0
    %48 = vst.msk [vmem:[#allocation3] sm:$0xff] %vm39, 0.0
    %s49 = sld [smem:[#allocation4]]
    %s50 = scalar_lea.vmem %s1, %s49
    %v51 = vld [vmem:[%s50] sm:$0x1]
    %vm52 = vcmask 253952
    %53 = vst.msk [vmem:[#allocation2] sm:$0x1] %vm52, %v51
    %s54 = sld [smem:[#allocation4 + $0x80]]
    %s55 = scalar_lea.vmem %s1, %s54
    %v56 = vld [vmem:[%s55] sm:$0x1]
    %57 = vst.msk [vmem:[#allocation2 + $0x1] sm:$0x1] %vm52, %v56
    %s58 = sld [smem:[#allocation4 + $0x1]]
    %s59 = scalar_lea.vmem %s1, %s58
    %v60 = vld [vmem:[%s59] sm:$0x1]
    %61 = vst.msk [vmem:[#allocation2 + $0x8] sm:$0x1] %vm52, %v60
    %s62 = sld [smem:[#allocation4 + $0x81]]
    %s63 = scalar_lea.vmem %s1, %s62
    %v64 = vld [vmem:[%s63] sm:$0x1]
    %65 = vst.msk [vmem:[#allocation2 + $0x9] sm:$0x1] %vm52, %v64
    %s66 = sld [smem:[#allocation4 + $0x2]]
    %s67 = scalar_lea.vmem %s1, %s66
    %v68 = vld [vmem:[%s67] sm:$0x1]
    %69 = vst.msk [vmem:[#allocation2 + $0x10] sm:$0x1] %vm52, %v68
    %s70 = sld [smem:[#allocation4 + $0x82]]
    %s71 = scalar_lea.vmem %s1, %s70
    %v72 = vld [vmem:[%s71] sm:$0x1]
    %73 = vst.msk [vmem:[#allocation2 + $0x11] sm:$0x1] %vm52, %v72
    %s74 = sld [smem:[#allocation4 + $0x3]]
    %s75 = scalar_lea.vmem %s1, %s74
    %v76 = vld [vmem:[%s75] sm:$0x1]
    %77 = vst.msk [vmem:[#allocation2 + $0x18] sm:$0x1] %vm52, %v76
    %s78 = sld [smem:[#allocation4 + $0x83]]
    %s79 = scalar_lea.vmem %s1, %s78
    %v80 = vld [vmem:[%s79] sm:$0x1]
    %81 = vst.msk [vmem:[#allocation2 + $0x19] sm:$0x1] %vm52, %v80
    %s82 = sld [smem:[#allocation4 + $0x4]]
    %s83 = scalar_lea.vmem %s1, %s82
    %v84 = vld [vmem:[%s83] sm:$0x1]
    %85 = vst.msk [vmem:[#allocation2 + $0x20] sm:$0x1] %vm52, %v84
    %s86 = sld [smem:[#allocation4 + $0x84]]
    %s87 = scalar_lea.vmem %s1, %s86
    %v88 = vld [vmem:[%s87] sm:$0x1]
    %89 = vst.msk [vmem:[#allocation2 + $0x21] sm:$0x1] %vm52, %v88
    %s90 = sld [smem:[#allocation4 + $0x5]]
    %s91 = scalar_lea.vmem %s1, %s90
    %v92 = vld [vmem:[%s91] sm:$0x1]
    %93 = vst.msk [vmem:[#allocation2 + $0x28] sm:$0x1] %vm52, %v92
    %s94 = sld [smem:[#allocation4 + $0x85]]
    %s95 = scalar_lea.vmem %s1, %s94
    %v96 = vld [vmem:[%s95] sm:$0x1]
    %97 = vst.msk [vmem:[#allocation2 + $0x29] sm:$0x1] %vm52, %v96
    %s98 = sld [smem:[#allocation4 + $0x6]]
    %s99 = scalar_lea.vmem %s1, %s98
    %v100 = vld [vmem:[%s99] sm:$0x1]
    %101 = vst.msk [vmem:[#allocation2 + $0x30] sm:$0x1] %vm52, %v100
    %s102 = sld [smem:[#allocation4 + $0x86]]
    %s103 = scalar_lea.vmem %s1, %s102
    %v104 = vld [vmem:[%s103] sm:$0x1]
    %105 = vst.msk [vmem:[#allocation2 + $0x31] sm:$0x1] %vm52, %v104
    %s106 = sld [smem:[#allocation4 + $0x7]]
    %s107 = scalar_lea.vmem %s1, %s106
    %v108 = vld [vmem:[%s107] sm:$0x1]
    %109 = vst.msk [vmem:[#allocation2 + $0x38] sm:$0x1] %vm52, %v108
    %s110 = sld [smem:[#allocation4 + $0x87]]
    %s111 = scalar_lea.vmem %s1, %s110
    %v112 = vld [vmem:[%s111] sm:$0x1]
    %113 = vst.msk [vmem:[#allocation2 + $0x39] sm:$0x1] %vm52, %v112
    %s114 = sld [smem:[#allocation4 + $0x7]]
    %s115 = scalar_lea.vmem %s2, %s114
    %v116 = vld [vmem:[%s115] sm:$0x1]
    %117 = vst.msk [vmem:[#allocation3] sm:$0x1] %vm52, %v116
    %s118 = sld [smem:[#allocation4 + $0x87]]
    %s119 = scalar_lea.vmem %s2, %s118
    %v120 = vld [vmem:[%s119] sm:$0x1]
    %121 = vst.msk [vmem:[#allocation3 + $0x1] sm:$0x1] %vm52, %v120
    %v122 = vld [vmem:[%s3] sm:$0xff]
    %v123 = vld [vmem:[%s3 + $0x8] sm:$0xff]
    %v124 = vld [vmem:[%s3 + $0x10] sm:$0xff]
    %v125 = vld [vmem:[%s3 + $0x18] sm:$0xff]
    %v126 = vld [vmem:[#allocation2] sm:$0xff]
    %v127 = vtanh.pop %v126
    %v128 = vld [vmem:[#allocation2 + $0x8] sm:$0xff]
    %v130 = vsel %vm39, %v127, 0
    %132 = vmatprep.subr.mxu0 0.0
    %133 = vmatpush1.msra.mxu0 0.0
    %134 = vmatprep.subr.mxu0 0.0
    %135 = vmatpush1.msra.mxu0 0.0
    %136 = vmatprep.subr.mxu0 0.0
    %137 = vmatpush1.msra.mxu0 0.0
    %138 = vmatprep.subr.mxu0 0.0
    %139 = vmatpush1.msra.mxu0 0.0
    %140 = vmatprep.subr.mxu0 0.0
    %141 = vmatpush1.msra.mxu0 0.0
    %142 = vmatprep.subr.mxu0 0.0
    %143 = vmatpush1.msra.mxu0 0.0
    %144 = vmatprep.subr.mxu0 0.0
    %145 = vmatpush1.msra.mxu0 0.0
    %146 = vmatprep.subr.mxu0 0.0
    %147 = vmatpush1.msra.mxu0 0.0
    %148 = vmatprep.subr.mxu0 0.0
    %149 = vmatpush1.msra.mxu0 0.0
    %150 = vmatprep.subr.mxu0 0.0
    %151 = vmatpush1.msra.mxu0 0.0
    %152 = vmatprep.subr.mxu0 0.0
    %153 = vmatpush1.msra.mxu0 0.0
    %154 = vmatprep.subr.mxu0 0.0
    %155 = vmatpush1.msra.mxu0 0.0
    %156 = vmatprep.subr.mxu0 0.0
    %157 = vmatpush1.msra.mxu0 %v125
    %158 = vmatprep.subr.mxu0 0.0
    %159 = vmatpush1.msra.mxu0 %v124
    %160 = vmatprep.subr.mxu0 0.0
    %161 = vmatpush1.msra.mxu0 %v123
    %162 = vmatprep.subr.mxu0 0.0
    %163 = vmatpush1.msra.mxu0 %v122
    %164 = vmatprep.subr.mxu0 0.0
    %165 = vmatpush2.msra.mxu0 0.0
    %166 = vmatprep.subr.mxu0 0.0
    %167 = vmatpush2.msra.mxu0 0.0
    %168 = vmatprep.subr.mxu0 0.0
    %169 = vmatpush2.msra.mxu0 0.0
    %170 = vmatprep.subr.mxu0 0.0
    %171 = vmatpush2.msra.mxu0 0.0
    %172 = vmatprep.subr.mxu0 0.0
    %173 = vmatpush2.msra.mxu0 0.0
    %174 = vmatprep.subr.mxu0 0.0
    %175 = vmatpush2.msra.mxu0 0.0
    %176 = vmatprep.subr.mxu0 0.0
    %177 = vmatpush2.msra.mxu0 0.0
    %178 = vmatprep.subr.mxu0 0.0
    %179 = vmatpush2.msra.mxu0 0.0
    %180 = vmatprep.subr.mxu0 0.0
    %181 = vmatpush2.msra.mxu0 0.0
    %182 = vmatprep.subr.mxu0 0.0
    %183 = vmatpush2.msra.mxu0 0.0
    %184 = vmatprep.subr.mxu0 0.0
    %185 = vmatpush2.msra.mxu0 0.0
    %186 = vmatprep.subr.mxu0 0.0
    %187 = vmatpush2.msra.mxu0 0.0
    %188 = vmatprep.subr.mxu0 0.0
    %189 = vmatpush2.msra.mxu0 0.0
    %190 = vmatprep.subr.mxu0 0.0
    %191 = vmatpush2.msra.mxu0 0.0
    %192 = vmatprep.subr.mxu0 0.0
    %193 = vmatpush2.msra.mxu0 0.0
    %194 = vmatprep.subr.mxu0 0.0
    %195 = vmatpush2.msra.mxu0 0.0
    %196 = vmatprep.mubr.f32.mxu0 0.0
    %197 = vmatmul.mubr.f32.gmra.mxu0 %v130
    %v198 = vpop.f32.mrf.mxu0
    %v199 = vadd.f32 0.0, %v198
    %v200 = vpop.f32.mrf.mxu0
    %201 = vdwg.mxu0
    %v202 = vadd.f32 %v128, %v199
    %v203 = vtanh.pop %v202
    %v204 = vld [vmem:[#allocation2 + $0x10] sm:$0xff]
    %v206 = vsel %vm39, %v203, 0
    %208 = vmatprep.subr.mxu0 0.0
    %209 = vmatpush1.msra.mxu0 0.0
    %210 = vmatprep.subr.mxu0 0.0
    %211 = vmatpush1.msra.mxu0 0.0
    %212 = vmatprep.subr.mxu0 0.0
    %213 = vmatpush1.msra.mxu0 0.0
    %214 = vmatprep.subr.mxu0 0.0
    %215 = vmatpush1.msra.mxu0 0.0
    %216 = vmatprep.subr.mxu0 0.0
    %217 = vmatpush1.msra.mxu0 0.0
    %218 = vmatprep.subr.mxu0 0.0
    %219 = vmatpush1.msra.mxu0 0.0
    %220 = vmatprep.subr.mxu0 0.0
    %221 = vmatpush1.msra.mxu0 0.0
    %222 = vmatprep.subr.mxu0 0.0
    %223 = vmatpush1.msra.mxu0 0.0
    %224 = vmatprep.subr.mxu0 0.0
    %225 = vmatpush1.msra.mxu0 0.0
    %226 = vmatprep.subr.mxu0 0.0
    %227 = vmatpush1.msra.mxu0 0.0
    %228 = vmatprep.subr.mxu0 0.0
    %229 = vmatpush1.msra.mxu0 0.0
    %230 = vmatprep.subr.mxu0 0.0
    %231 = vmatpush1.msra.mxu0 0.0
    %232 = vmatprep.subr.mxu0 0.0
    %233 = vmatpush1.msra.mxu0 %v125
    %234 = vmatprep.subr.mxu0 0.0
    %235 = vmatpush1.msra.mxu0 %v124
    %236 = vmatprep.subr.mxu0 0.0
    %237 = vmatpush1.msra.mxu0 %v123
    %238 = vmatprep.subr.mxu0 0.0
    %239 = vmatpush1.msra.mxu0 %v122
    %240 = vmatprep.subr.mxu0 0.0
    %241 = vmatpush2.msra.mxu0 0.0
    %242 = vmatprep.subr.mxu0 0.0
    %243 = vmatpush2.msra.mxu0 0.0
    %244 = vmatprep.subr.mxu0 0.0
    %245 = vmatpush2.msra.mxu0 0.0
    %246 = vmatprep.subr.mxu0 0.0
    %247 = vmatpush2.msra.mxu0 0.0
    %248 = vmatprep.subr.mxu0 0.0
    %249 = vmatpush2.msra.mxu0 0.0
    %250 = vmatprep.subr.mxu0 0.0
    %251 = vmatpush2.msra.mxu0 0.0
    %252 = vmatprep.subr.mxu0 0.0
    %253 = vmatpush2.msra.mxu0 0.0
    %254 = vmatprep.subr.mxu0 0.0
    %255 = vmatpush2.msra.mxu0 0.0
    %256 = vmatprep.subr.mxu0 0.0
    %257 = vmatpush2.msra.mxu0 0.0
    %258 = vmatprep.subr.mxu0 0.0
    %259 = vmatpush2.msra.mxu0 0.0
    %260 = vmatprep.subr.mxu0 0.0
    %261 = vmatpush2.msra.mxu0 0.0
    %262 = vmatprep.subr.mxu0 0.0
    %263 = vmatpush2.msra.mxu0 0.0
    %264 = vmatprep.subr.mxu0 0.0
    %265 = vmatpush2.msra.mxu0 0.0
    %266 = vmatprep.subr.mxu0 0.0
    %267 = vmatpush2.msra.mxu0 0.0
    %268 = vmatprep.subr.mxu0 0.0
    %269 = vmatpush2.msra.mxu0 0.0
    %270 = vmatprep.subr.mxu0 0.0
    %271 = vmatpush2.msra.mxu0 0.0
    %272 = vmatprep.mubr.f32.mxu0 0.0
    %273 = vmatmul.mubr.f32.gmra.mxu0 %v206
    %v274 = vpop.f32.mrf.mxu0
    %v275 = vadd.f32 0.0, %v274
    %v276 = vpop.f32.mrf.mxu0
    %277 = vdwg.mxu0
    %v278 = vadd.f32 %v204, %v275
    %v279 = vtanh.pop %v278
    %v280 = vld [vmem:[#allocation2 + $0x18] sm:$0xff]
    %v282 = vsel %vm39, %v279, 0
    %284 = vmatprep.subr.mxu0 0.0
    %285 = vmatpush1.msra.mxu0 0.0
    %286 = vmatprep.subr.mxu0 0.0
    %287 = vmatpush1.msra.mxu0 0.0
    %288 = vmatprep.subr.mxu0 0.0
    %289 = vmatpush1.msra.mxu0 0.0
    %290 = vmatprep.subr.mxu0 0.0
    %291 = vmatpush1.msra.mxu0 0.0
    %292 = vmatprep.subr.mxu0 0.0
    %293 = vmatpush1.msra.mxu0 0.0
    %294 = vmatprep.subr.mxu0 0.0
    %295 = vmatpush1.msra.mxu0 0.0
    %296 = vmatprep.subr.mxu0 0.0
    %297 = vmatpush1.msra.mxu0 0.0
    %298 = vmatprep.subr.mxu0 0.0
    %299 = vmatpush1.msra.mxu0 0.0
    %300 = vmatprep.subr.mxu0 0.0
    %301 = vmatpush1.msra.mxu0 0.0
    %302 = vmatprep.subr.mxu0 0.0
    %303 = vmatpush1.msra.mxu0 0.0
    %304 = vmatprep.subr.mxu0 0.0
    %305 = vmatpush1.msra.mxu0 0.0
    %306 = vmatprep.subr.mxu0 0.0
    %307 = vmatpush1.msra.mxu0 0.0
    %308 = vmatprep.subr.mxu0 0.0
    %309 = vmatpush1.msra.mxu0 %v125
    %310 = vmatprep.subr.mxu0 0.0
    %311 = vmatpush1.msra.mxu0 %v124
    %312 = vmatprep.subr.mxu0 0.0
    %313 = vmatpush1.msra.mxu0 %v123
    %314 = vmatprep.subr.mxu0 0.0
    %315 = vmatpush1.msra.mxu0 %v122
    %316 = vmatprep.subr.mxu0 0.0
    %317 = vmatpush2.msra.mxu0 0.0
    %318 = vmatprep.subr.mxu0 0.0
    %319 = vmatpush2.msra.mxu0 0.0
    %320 = vmatprep.subr.mxu0 0.0
    %321 = vmatpush2.msra.mxu0 0.0
    %322 = vmatprep.subr.mxu0 0.0
    %323 = vmatpush2.msra.mxu0 0.0
    %324 = vmatprep.subr.mxu0 0.0
    %325 = vmatpush2.msra.mxu0 0.0
    %326 = vmatprep.subr.mxu0 0.0
    %327 = vmatpush2.msra.mxu0 0.0
    %328 = vmatprep.subr.mxu0 0.0
    %329 = vmatpush2.msra.mxu0 0.0
    %330 = vmatprep.subr.mxu0 0.0
    %331 = vmatpush2.msra.mxu0 0.0
    %332 = vmatprep.subr.mxu0 0.0
    %333 = vmatpush2.msra.mxu0 0.0
    %334 = vmatprep.subr.mxu0 0.0
    %335 = vmatpush2.msra.mxu0 0.0
    %336 = vmatprep.subr.mxu0 0.0
    %337 = vmatpush2.msra.mxu0 0.0
    %338 = vmatprep.subr.mxu0 0.0
    %339 = vmatpush2.msra.mxu0 0.0
    %340 = vmatprep.subr.mxu0 0.0
    %341 = vmatpush2.msra.mxu0 0.0
    %342 = vmatprep.subr.mxu0 0.0
    %343 = vmatpush2.msra.mxu0 0.0
    %344 = vmatprep.subr.mxu0 0.0
    %345 = vmatpush2.msra.mxu0 0.0
    %346 = vmatprep.subr.mxu0 0.0
    %347 = vmatpush2.msra.mxu0 0.0
    %348 = vmatprep.mubr.f32.mxu0 0.0
    %349 = vmatmul.mubr.f32.gmra.mxu0 %v282
    %v350 = vpop.f32.mrf.mxu0
    %v351 = vadd.f32 0.0, %v350
    %v352 = vpop.f32.mrf.mxu0
    %353 = vdwg.mxu0
    %v354 = vadd.f32 %v280, %v351
    %v355 = vtanh.pop %v354
    %v356 = vld [vmem:[#allocation2 + $0x20] sm:$0xff]
    %v358 = vsel %vm39, %v355, 0
    %360 = vmatprep.subr.mxu0 0.0
    %361 = vmatpush1.msra.mxu0 0.0
    %362 = vmatprep.subr.mxu0 0.0
    %363 = vmatpush1.msra.mxu0 0.0
    %364 = vmatprep.subr.mxu0 0.0
    %365 = vmatpush1.msra.mxu0 0.0
    %366 = vmatprep.subr.mxu0 0.0
    %367 = vmatpush1.msra.mxu0 0.0
    %368 = vmatprep.subr.mxu0 0.0
    %369 = vmatpush1.msra.mxu0 0.0
    %370 = vmatprep.subr.mxu0 0.0
    %371 = vmatpush1.msra.mxu0 0.0
    %372 = vmatprep.subr.mxu0 0.0
    %373 = vmatpush1.msra.mxu0 0.0
    %374 = vmatprep.subr.mxu0 0.0
    %375 = vmatpush1.msra.mxu0 0.0
    %376 = vmatprep.subr.mxu0 0.0
    %377 = vmatpush1.msra.mxu0 0.0
    %378 = vmatprep.subr.mxu0 0.0
    %379 = vmatpush1.msra.mxu0 0.0
    %380 = vmatprep.subr.mxu0 0.0
    %381 = vmatpush1.msra.mxu0 0.0
    %382 = vmatprep.subr.mxu0 0.0
    %383 = vmatpush1.msra.mxu0 0.0
    %384 = vmatprep.subr.mxu0 0.0
    %385 = vmatpush1.msra.mxu0 %v125
    %386 = vmatprep.subr.mxu0 0.0
    %387 = vmatpush1.msra.mxu0 %v124
    %388 = vmatprep.subr.mxu0 0.0
    %389 = vmatpush1.msra.mxu0 %v123
    %390 = vmatprep.subr.mxu0 0.0
    %391 = vmatpush1.msra.mxu0 %v122
    %392 = vmatprep.subr.mxu0 0.0
    %393 = vmatpush2.msra.mxu0 0.0
    %394 = vmatprep.subr.mxu0 0.0
    %395 = vmatpush2.msra.mxu0 0.0
    %396 = vmatprep.subr.mxu0 0.0
    %397 = vmatpush2.msra.mxu0 0.0
    %398 = vmatprep.subr.mxu0 0.0
    %399 = vmatpush2.msra.mxu0 0.0
    %400 = vmatprep.subr.mxu0 0.0
    %401 = vmatpush2.msra.mxu0 0.0
    %402 = vmatprep.subr.mxu0 0.0
    %403 = vmatpush2.msra.mxu0 0.0
    %404 = vmatprep.subr.mxu0 0.0
    %405 = vmatpush2.msra.mxu0 0.0
    %406 = vmatprep.subr.mxu0 0.0
    %407 = vmatpush2.msra.mxu0 0.0
    %408 = vmatprep.subr.mxu0 0.0
    %409 = vmatpush2.msra.mxu0 0.0
    %410 = vmatprep.subr.mxu0 0.0
    %411 = vmatpush2.msra.mxu0 0.0
    %412 = vmatprep.subr.mxu0 0.0
    %413 = vmatpush2.msra.mxu0 0.0
    %414 = vmatprep.subr.mxu0 0.0
    %415 = vmatpush2.msra.mxu0 0.0
    %416 = vmatprep.subr.mxu0 0.0
    %417 = vmatpush2.msra.mxu0 0.0
    %418 = vmatprep.subr.mxu0 0.0
    %419 = vmatpush2.msra.mxu0 0.0
    %420 = vmatprep.subr.mxu0 0.0
    %421 = vmatpush2.msra.mxu0 0.0
    %422 = vmatprep.subr.mxu0 0.0
    %423 = vmatpush2.msra.mxu0 0.0
    %424 = vmatprep.mubr.f32.mxu0 0.0
    %425 = vmatmul.mubr.f32.gmra.mxu0 %v358
    %v426 = vpop.f32.mrf.mxu0
    %v427 = vadd.f32 0.0, %v426
    %v428 = vpop.f32.mrf.mxu0
    %429 = vdwg.mxu0
    %v430 = vadd.f32 %v356, %v427
    %v431 = vtanh.pop %v430
    %v432 = vld [vmem:[#allocation2 + $0x28] sm:$0xff]
    %v434 = vsel %vm39, %v431, 0
    %436 = vmatprep.subr.mxu0 0.0
    %437 = vmatpush1.msra.mxu0 0.0
    %438 = vmatprep.subr.mxu0 0.0
    %439 = vmatpush1.msra.mxu0 0.0
    %440 = vmatprep.subr.mxu0 0.0
    %441 = vmatpush1.msra.mxu0 0.0
    %442 = vmatprep.subr.mxu0 0.0
    %443 = vmatpush1.msra.mxu0 0.0
    %444 = vmatprep.subr.mxu0 0.0
    %445 = vmatpush1.msra.mxu0 0.0
    %446 = vmatprep.subr.mxu0 0.0
    %447 = vmatpush1.msra.mxu0 0.0
    %448 = vmatprep.subr.mxu0 0.0
    %449 = vmatpush1.msra.mxu0 0.0
    %450 = vmatprep.subr.mxu0 0.0
    %451 = vmatpush1.msra.mxu0 0.0
    %452 = vmatprep.subr.mxu0 0.0
    %453 = vmatpush1.msra.mxu0 0.0
    %454 = vmatprep.subr.mxu0 0.0
    %455 = vmatpush1.msra.mxu0 0.0
    %456 = vmatprep.subr.mxu0 0.0
    %457 = vmatpush1.msra.mxu0 0.0
    %458 = vmatprep.subr.mxu0 0.0
    %459 = vmatpush1.msra.mxu0 0.0
    %460 = vmatprep.subr.mxu0 0.0
    %461 = vmatpush1.msra.mxu0 %v125
    %462 = vmatprep.subr.mxu0 0.0
    %463 = vmatpush1.msra.mxu0 %v124
    %464 = vmatprep.subr.mxu0 0.0
    %465 = vmatpush1.msra.mxu0 %v123
    %466 = vmatprep.subr.mxu0 0.0
    %467 = vmatpush1.msra.mxu0 %v122
    %468 = vmatprep.subr.mxu0 0.0
    %469 = vmatpush2.msra.mxu0 0.0
    %470 = vmatprep.subr.mxu0 0.0
    %471 = vmatpush2.msra.mxu0 0.0
    %472 = vmatprep.subr.mxu0 0.0
    %473 = vmatpush2.msra.mxu0 0.0
    %474 = vmatprep.subr.mxu0 0.0
    %475 = vmatpush2.msra.mxu0 0.0
    %476 = vmatprep.subr.mxu0 0.0
    %477 = vmatpush2.msra.mxu0 0.0
    %478 = vmatprep.subr.mxu0 0.0
    %479 = vmatpush2.msra.mxu0 0.0
    %480 = vmatprep.subr.mxu0 0.0
    %481 = vmatpush2.msra.mxu0 0.0
    %482 = vmatprep.subr.mxu0 0.0
    %483 = vmatpush2.msra.mxu0 0.0
    %484 = vmatprep.subr.mxu0 0.0
    %485 = vmatpush2.msra.mxu0 0.0
    %486 = vmatprep.subr.mxu0 0.0
    %487 = vmatpush2.msra.mxu0 0.0
    %488 = vmatprep.subr.mxu0 0.0
    %489 = vmatpush2.msra.mxu0 0.0
    %490 = vmatprep.subr.mxu0 0.0
    %491 = vmatpush2.msra.mxu0 0.0
    %492 = vmatprep.subr.mxu0 0.0
    %493 = vmatpush2.msra.mxu0 0.0
    %494 = vmatprep.subr.mxu0 0.0
    %495 = vmatpush2.msra.mxu0 0.0
    %496 = vmatprep.subr.mxu0 0.0
    %497 = vmatpush2.msra.mxu0 0.0
    %498 = vmatprep.subr.mxu0 0.0
    %499 = vmatpush2.msra.mxu0 0.0
    %500 = vmatprep.mubr.f32.mxu0 0.0
    %501 = vmatmul.mubr.f32.gmra.mxu0 %v434
    %v502 = vpop.f32.mrf.mxu0
    %v503 = vadd.f32 0.0, %v502
    %v504 = vpop.f32.mrf.mxu0
    %505 = vdwg.mxu0
    %v506 = vadd.f32 %v432, %v503
    %v507 = vtanh.pop %v506
    %v508 = vld [vmem:[#allocation2 + $0x30] sm:$0xff]
    %v510 = vsel %vm39, %v507, 0
    %512 = vmatprep.subr.mxu0 0.0
    %513 = vmatpush1.msra.mxu0 0.0
    %514 = vmatprep.subr.mxu0 0.0
    %515 = vmatpush1.msra.mxu0 0.0
    %516 = vmatprep.subr.mxu0 0.0
    %517 = vmatpush1.msra.mxu0 0.0
    %518 = vmatprep.subr.mxu0 0.0
    %519 = vmatpush1.msra.mxu0 0.0
    %520 = vmatprep.subr.mxu0 0.0
    %521 = vmatpush1.msra.mxu0 0.0
    %522 = vmatprep.subr.mxu0 0.0
    %523 = vmatpush1.msra.mxu0 0.0
    %524 = vmatprep.subr.mxu0 0.0
    %525 = vmatpush1.msra.mxu0 0.0
    %526 = vmatprep.subr.mxu0 0.0
    %527 = vmatpush1.msra.mxu0 0.0
    %528 = vmatprep.subr.mxu0 0.0
    %529 = vmatpush1.msra.mxu0 0.0
    %530 = vmatprep.subr.mxu0 0.0
    %531 = vmatpush1.msra.mxu0 0.0
    %532 = vmatprep.subr.mxu0 0.0
    %533 = vmatpush1.msra.mxu0 0.0
    %534 = vmatprep.subr.mxu0 0.0
    %535 = vmatpush1.msra.mxu0 0.0
    %536 = vmatprep.subr.mxu0 0.0
    %537 = vmatpush1.msra.mxu0 %v125
    %538 = vmatprep.subr.mxu0 0.0
    %539 = vmatpush1.msra.mxu0 %v124
    %540 = vmatprep.subr.mxu0 0.0
    %541 = vmatpush1.msra.mxu0 %v123
    %542 = vmatprep.subr.mxu0 0.0
    %543 = vmatpush1.msra.mxu0 %v122
    %544 = vmatprep.subr.mxu0 0.0
    %545 = vmatpush2.msra.mxu0 0.0
    %546 = vmatprep.subr.mxu0 0.0
    %547 = vmatpush2.msra.mxu0 0.0
    %548 = vmatprep.subr.mxu0 0.0
    %549 = vmatpush2.msra.mxu0 0.0
    %550 = vmatprep.subr.mxu0 0.0
    %551 = vmatpush2.msra.mxu0 0.0
    %552 = vmatprep.subr.mxu0 0.0
    %553 = vmatpush2.msra.mxu0 0.0
    %554 = vmatprep.subr.mxu0 0.0
    %555 = vmatpush2.msra.mxu0 0.0
    %556 = vmatprep.subr.mxu0 0.0
    %557 = vmatpush2.msra.mxu0 0.0
    %558 = vmatprep.subr.mxu0 0.0
    %559 = vmatpush2.msra.mxu0 0.0
    %560 = vmatprep.subr.mxu0 0.0
    %561 = vmatpush2.msra.mxu0 0.0
    %562 = vmatprep.subr.mxu0 0.0
    %563 = vmatpush2.msra.mxu0 0.0
    %564 = vmatprep.subr.mxu0 0.0
    %565 = vmatpush2.msra.mxu0 0.0
    %566 = vmatprep.subr.mxu0 0.0
    %567 = vmatpush2.msra.mxu0 0.0
    %568 = vmatprep.subr.mxu0 0.0
    %569 = vmatpush2.msra.mxu0 0.0
    %570 = vmatprep.subr.mxu0 0.0
    %571 = vmatpush2.msra.mxu0 0.0
    %572 = vmatprep.subr.mxu0 0.0
    %573 = vmatpush2.msra.mxu0 0.0
    %574 = vmatprep.subr.mxu0 0.0
    %575 = vmatpush2.msra.mxu0 0.0
    %576 = vmatprep.mubr.f32.mxu0 0.0
    %577 = vmatmul.mubr.f32.gmra.mxu0 %v510
    %v578 = vpop.f32.mrf.mxu0
    %v579 = vadd.f32 0.0, %v578
    %v580 = vpop.f32.mrf.mxu0
    %581 = vdwg.mxu0
    %v582 = vadd.f32 %v508, %v579
    %v583 = vtanh.pop %v582
    %v584 = vld [vmem:[#allocation2 + $0x38] sm:$0xff]
    %v586 = vsel %vm39, %v583, 0
    %588 = vmatprep.subr.mxu0 0.0
    %589 = vmatpush1.msra.mxu0 0.0
    %590 = vmatprep.subr.mxu0 0.0
    %591 = vmatpush1.msra.mxu0 0.0
    %592 = vmatprep.subr.mxu0 0.0
    %593 = vmatpush1.msra.mxu0 0.0
    %594 = vmatprep.subr.mxu0 0.0
    %595 = vmatpush1.msra.mxu0 0.0
    %596 = vmatprep.subr.mxu0 0.0
    %597 = vmatpush1.msra.mxu0 0.0
    %598 = vmatprep.subr.mxu0 0.0
    %599 = vmatpush1.msra.mxu0 0.0
    %600 = vmatprep.subr.mxu0 0.0
    %601 = vmatpush1.msra.mxu0 0.0
    %602 = vmatprep.subr.mxu0 0.0
    %603 = vmatpush1.msra.mxu0 0.0
    %604 = vmatprep.subr.mxu0 0.0
    %605 = vmatpush1.msra.mxu0 0.0
    %606 = vmatprep.subr.mxu0 0.0
    %607 = vmatpush1.msra.mxu0 0.0
    %608 = vmatprep.subr.mxu0 0.0
    %609 = vmatpush1.msra.mxu0 0.0
    %610 = vmatprep.subr.mxu0 0.0
    %611 = vmatpush1.msra.mxu0 0.0
    %612 = vmatprep.subr.mxu0 0.0
    %613 = vmatpush1.msra.mxu0 %v125
    %614 = vmatprep.subr.mxu0 0.0
    %615 = vmatpush1.msra.mxu0 %v124
    %616 = vmatprep.subr.mxu0 0.0
    %617 = vmatpush1.msra.mxu0 %v123
    %618 = vmatprep.subr.mxu0 0.0
    %619 = vmatpush1.msra.mxu0 %v122
    %620 = vmatprep.subr.mxu0 0.0
    %621 = vmatpush2.msra.mxu0 0.0
    %622 = vmatprep.subr.mxu0 0.0
    %623 = vmatpush2.msra.mxu0 0.0
    %624 = vmatprep.subr.mxu0 0.0
    %625 = vmatpush2.msra.mxu0 0.0
    %626 = vmatprep.subr.mxu0 0.0
    %627 = vmatpush2.msra.mxu0 0.0
    %628 = vmatprep.subr.mxu0 0.0
    %629 = vmatpush2.msra.mxu0 0.0
    %630 = vmatprep.subr.mxu0 0.0
    %631 = vmatpush2.msra.mxu0 0.0
    %632 = vmatprep.subr.mxu0 0.0
    %633 = vmatpush2.msra.mxu0 0.0
    %634 = vmatprep.subr.mxu0 0.0
    %635 = vmatpush2.msra.mxu0 0.0
    %636 = vmatprep.subr.mxu0 0.0
    %637 = vmatpush2.msra.mxu0 0.0
    %638 = vmatprep.subr.mxu0 0.0
    %639 = vmatpush2.msra.mxu0 0.0
    %640 = vmatprep.subr.mxu0 0.0
    %641 = vmatpush2.msra.mxu0 0.0
    %642 = vmatprep.subr.mxu0 0.0
    %643 = vmatpush2.msra.mxu0 0.0
    %644 = vmatprep.subr.mxu0 0.0
    %645 = vmatpush2.msra.mxu0 0.0
    %646 = vmatprep.subr.mxu0 0.0
    %647 = vmatpush2.msra.mxu0 0.0
    %648 = vmatprep.subr.mxu0 0.0
    %649 = vmatpush2.msra.mxu0 0.0
    %650 = vmatprep.subr.mxu0 0.0
    %651 = vmatpush2.msra.mxu0 0.0
    %652 = vmatprep.mubr.f32.mxu0 0.0
    %653 = vmatmul.mubr.f32.gmra.mxu0 %v586
    %v654 = vpop.f32.mrf.mxu0
    %v655 = vadd.f32 0.0, %v654
    %v656 = vpop.f32.mrf.mxu0
    %657 = vdwg.mxu0
    %v658 = vadd.f32 %v584, %v655
    %v659 = vtanh.pop %v658
    %v660 = vld [vmem:[#allocation3] sm:$0xff]
    %v661 = vtanh.pop %v660
    %v662 = vld [vmem:[%s4] sm:$0xff]
    %v663 = vld [vmem:[%s4 + $0x8] sm:$0xff]
    %v664 = vld [vmem:[%s4 + $0x10] sm:$0xff]
    %v665 = vld [vmem:[%s4 + $0x18] sm:$0xff]
    %v666 = vld [vmem:[%s5] sm:$0xff]
    %v667 = vld [vmem:[%s5 + $0x8] sm:$0xff]
    %v668 = vld [vmem:[%s5 + $0x10] sm:$0xff]
    %v669 = vld [vmem:[%s5 + $0x18] sm:$0xff]
    %v671 = vsel %vm39, %v661, 0
    %673 = vmatprep.subr.mxu0 0.0
    %674 = vmatpush1.msra.mxu0 0.0
    %675 = vmatprep.subr.mxu0 0.0
    %676 = vmatpush1.msra.mxu0 0.0
    %677 = vmatprep.subr.mxu0 0.0
    %678 = vmatpush1.msra.mxu0 0.0
    %679 = vmatprep.subr.mxu0 0.0
    %680 = vmatpush1.msra.mxu0 0.0
    %681 = vmatprep.subr.mxu0 0.0
    %682 = vmatpush1.msra.mxu0 0.0
    %683 = vmatprep.subr.mxu0 0.0
    %684 = vmatpush1.msra.mxu0 0.0
    %685 = vmatprep.subr.mxu0 0.0
    %686 = vmatpush1.msra.mxu0 0.0
    %687 = vmatprep.subr.mxu0 0.0
    %688 = vmatpush1.msra.mxu0 0.0
    %689 = vmatprep.subr.mxu0 0.0
    %690 = vmatpush1.msra.mxu0 0.0
    %691 = vmatprep.subr.mxu0 0.0
    %692 = vmatpush1.msra.mxu0 0.0
    %693 = vmatprep.subr.mxu0 0.0
    %694 = vmatpush1.msra.mxu0 0.0
    %695 = vmatprep.subr.mxu0 0.0
    %696 = vmatpush1.msra.mxu0 0.0
    %697 = vmatprep.subr.mxu0 0.0
    %698 = vmatpush1.msra.mxu0 %v669
    %699 = vmatprep.subr.mxu0 0.0
    %700 = vmatpush1.msra.mxu0 %v668
    %701 = vmatprep.subr.mxu0 0.0
    %702 = vmatpush1.msra.mxu0 %v667
    %703 = vmatprep.subr.mxu0 0.0
    %704 = vmatpush1.msra.mxu0 %v666
    %705 = vmatprep.subr.mxu0 0.0
    %706 = vmatpush2.msra.mxu0 0.0
    %707 = vmatprep.subr.mxu0 0.0
    %708 = vmatpush2.msra.mxu0 0.0
    %709 = vmatprep.subr.mxu0 0.0
    %710 = vmatpush2.msra.mxu0 0.0
    %711 = vmatprep.subr.mxu0 0.0
    %712 = vmatpush2.msra.mxu0 0.0
    %713 = vmatprep.subr.mxu0 0.0
    %714 = vmatpush2.msra.mxu0 0.0
    %715 = vmatprep.subr.mxu0 0.0
    %716 = vmatpush2.msra.mxu0 0.0
    %717 = vmatprep.subr.mxu0 0.0
    %718 = vmatpush2.msra.mxu0 0.0
    %719 = vmatprep.subr.mxu0 0.0
    %720 = vmatpush2.msra.mxu0 0.0
    %721 = vmatprep.subr.mxu0 0.0
    %722 = vmatpush2.msra.mxu0 0.0
    %723 = vmatprep.subr.mxu0 0.0
    %724 = vmatpush2.msra.mxu0 0.0
    %725 = vmatprep.subr.mxu0 0.0
    %726 = vmatpush2.msra.mxu0 0.0
    %727 = vmatprep.subr.mxu0 0.0
    %728 = vmatpush2.msra.mxu0 0.0
    %729 = vmatprep.subr.mxu0 0.0
    %730 = vmatpush2.msra.mxu0 0.0
    %731 = vmatprep.subr.mxu0 0.0
    %732 = vmatpush2.msra.mxu0 0.0
    %733 = vmatprep.subr.mxu0 0.0
    %734 = vmatpush2.msra.mxu0 0.0
    %735 = vmatprep.subr.mxu0 0.0
    %736 = vmatpush2.msra.mxu0 0.0
    %737 = vmatprep.mubr.f32.mxu0 0.0
    %738 = vmatmul.mubr.f32.gmra.mxu0 %v671
    %v739 = vpop.f32.mrf.mxu0
    %v740 = vadd.f32 0.0, %v739
    %v741 = vpop.f32.mrf.mxu0
    %742 = vdwg.mxu0
    %v744 = vsel %vm39, %v659, 0
    %746 = vmatprep.subr.mxu0 0.0
    %747 = vmatpush1.msra.mxu0 0.0
    %748 = vmatprep.subr.mxu0 0.0
    %749 = vmatpush1.msra.mxu0 0.0
    %750 = vmatprep.subr.mxu0 0.0
    %751 = vmatpush1.msra.mxu0 0.0
    %752 = vmatprep.subr.mxu0 0.0
    %753 = vmatpush1.msra.mxu0 0.0
    %754 = vmatprep.subr.mxu0 0.0
    %755 = vmatpush1.msra.mxu0 0.0
    %756 = vmatprep.subr.mxu0 0.0
    %757 = vmatpush1.msra.mxu0 0.0
    %758 = vmatprep.subr.mxu0 0.0
    %759 = vmatpush1.msra.mxu0 0.0
    %760 = vmatprep.subr.mxu0 0.0
    %761 = vmatpush1.msra.mxu0 0.0
    %762 = vmatprep.subr.mxu0 0.0
    %763 = vmatpush1.msra.mxu0 0.0
    %764 = vmatprep.subr.mxu0 0.0
    %765 = vmatpush1.msra.mxu0 0.0
    %766 = vmatprep.subr.mxu0 0.0
    %767 = vmatpush1.msra.mxu0 0.0
    %768 = vmatprep.subr.mxu0 0.0
    %769 = vmatpush1.msra.mxu0 0.0
    %770 = vmatprep.subr.mxu0 0.0
    %771 = vmatpush1.msra.mxu0 %v665
    %772 = vmatprep.subr.mxu0 0.0
    %773 = vmatpush1.msra.mxu0 %v664
    %774 = vmatprep.subr.mxu0 0.0
    %775 = vmatpush1.msra.mxu0 %v663
    %776 = vmatprep.subr.mxu0 0.0
    %777 = vmatpush1.msra.mxu0 %v662
    %778 = vmatprep.subr.mxu0 0.0
    %779 = vmatpush2.msra.mxu0 0.0
    %780 = vmatprep.subr.mxu0 0.0
    %781 = vmatpush2.msra.mxu0 0.0
    %782 = vmatprep.subr.mxu0 0.0
    %783 = vmatpush2.msra.mxu0 0.0
    %784 = vmatprep.subr.mxu0 0.0
    %785 = vmatpush2.msra.mxu0 0.0
    %786 = vmatprep.subr.mxu0 0.0
    %787 = vmatpush2.msra.mxu0 0.0
    %788 = vmatprep.subr.mxu0 0.0
    %789 = vmatpush2.msra.mxu0 0.0
    %790 = vmatprep.subr.mxu0 0.0
    %791 = vmatpush2.msra.mxu0 0.0
    %792 = vmatprep.subr.mxu0 0.0
    %793 = vmatpush2.msra.mxu0 0.0
    %794 = vmatprep.subr.mxu0 0.0
    %795 = vmatpush2.msra.mxu0 0.0
    %796 = vmatprep.subr.mxu0 0.0
    %797 = vmatpush2.msra.mxu0 0.0
    %798 = vmatprep.subr.mxu0 0.0
    %799 = vmatpush2.msra.mxu0 0.0
    %800 = vmatprep.subr.mxu0 0.0
    %801 = vmatpush2.msra.mxu0 0.0
    %802 = vmatprep.subr.mxu0 0.0
    %803 = vmatpush2.msra.mxu0 0.0
    %804 = vmatprep.subr.mxu0 0.0
    %805 = vmatpush2.msra.mxu0 0.0
    %806 = vmatprep.subr.mxu0 0.0
    %807 = vmatpush2.msra.mxu0 0.0
    %808 = vmatprep.subr.mxu0 0.0
    %809 = vmatpush2.msra.mxu0 0.0
    %810 = vmatprep.mubr.f32.mxu0 0.0
    %811 = vmatmul.mubr.f32.gmra.mxu0 %v744
    %v812 = vpop.f32.mrf.mxu0
    %v813 = vadd.f32 %v740, %v812
    %v814 = vpop.f32.mrf.mxu0
    %815 = vdwg.mxu0
    %v816 = vld [vmem:[%s6] sm:$0x1]
    %v818 = vlaneseq
    %v819 = vshrl.u32 %v818, 7
    %v820 = vsub.s32 0, %v819
    %v821 = vrot.slane %v816, %v820
    %v823 = vadd.f32 %v813, %v821
    %824 = vst [vmem:[%s7] sm:$0xff] %v823
    // Predicated region
    $region34: #{rnn_model_forward.1} parent=1 // pred_check
      _
    $region35: #{rnn_model_forward.1} parent=1 // pred_check_branch
      %826 = sbr.rel (0) target = $region37
    $region36: #{rnn_model_forward.1} parent=1 // pred_region
      _
    $region37: #{rnn_model_forward.1} parent=1 // pred_fallthru
      _
    // Predicated region
    $region38: #{rnn_model_forward.1} parent=1 // pred_check
      _
    $region39: #{rnn_model_forward.1} parent=1 // pred_check_branch
      %828 = sbr.rel (0) target = $region41
    $region40: #{rnn_model_forward.1} parent=1 // pred_region
      _
    $region41: #{rnn_model_forward.1} parent=1 // pred_fallthru
      _
    %829 = vsyncpa [#allocation5], 1

</llo_original>
